<compile_context>
chip_gen: v5e
topology: v5e:2x2
jax: 0.10.0
libtpu: 0.0.40
codegen_flags: <defaults>
</compile_context>

<pallas_src>
import functools
import math

import jax
import jax.numpy as jnp
from jax.experimental import pallas as pl
from jax.experimental.pallas import tpu as pltpu


def _cmal_precision_kernel(sel_ref, p0_ref, p3_ref, side_ref, tp_ref, fp_ref,
                           tp_acc, fp_acc, *, G, direction, exact_dot):
    i = pl.program_id(0)

    @pl.when(i == 0)
    def _init():
        tp_acc[...] = jnp.zeros_like(tp_acc)
        fp_acc[...] = jnp.zeros_like(fp_acc)
        tp_ref[...] = jnp.zeros_like(tp_ref)
        fp_ref[...] = jnp.zeros_like(fp_ref)

    # s[r, g] = sum_k p0[r, g*K + k] * p3[r, g*K + k]  (segmented lane sum on MXU)
    cdt = sel_ref.dtype
    prod = p0_ref[...].astype(cdt) * p3_ref[...].astype(cdt)
    if exact_dot:
        s = jnp.dot(prod, sel_ref[...], preferred_element_type=jnp.float32,
                    precision=jax.lax.Precision.HIGHEST)
    else:
        s = jnp.dot(prod, sel_ref[...], preferred_element_type=jnp.float32)

    side = side_ref[...].astype(jnp.float32)          # [TM, 2G] = [yTrue | thr]
    yt = side[:, :G]
    thr = side[:, G:]

    if direction == "below":
        tp = (s < thr) & (yt < thr)
        fp = (s <= thr) & (yt > thr)
    else:  # 'above'
        pred_pos = s >= thr
        tp = pred_pos & (yt >= thr)
        fp = pred_pos & (yt < thr)

    # Cheap per-step partial (sublane reduce only); the full cross-lane reduce +
    # output-block write happens exactly once at the last grid step.
    tp_acc[...] += jnp.sum(tp.astype(jnp.float32), axis=0, keepdims=True)
    fp_acc[...] += jnp.sum(fp.astype(jnp.float32), axis=0, keepdims=True)

    @pl.when(i == pl.num_programs(0) - 1)
    def _fin():
        tp_ref[...] = jnp.zeros_like(tp_ref) + jnp.sum(tp_acc[...])
        fp_ref[...] = jnp.zeros_like(fp_ref) + jnp.sum(fp_acc[...])


@functools.partial(jax.jit, static_argnames=("direction",))
def _cmal_precision_counts(p0, p3, yTrue, thr_col, *, direction="above"):
    """Per-batch (tp, fp) counts.  p0, p3: [B,T,K]; yTrue: [B,T]; thr_col: [B]."""
    B, T, K = p0.shape
    M = B * T

    p0 = p0.reshape(M, K)
    p3 = p3.reshape(M, K)
    yt = jnp.asarray(yTrue, jnp.float32).reshape(M)
    thr = jnp.broadcast_to(jnp.asarray(thr_col, jnp.float32)[:, None], (B, T)).reshape(M)

    # Fold G consecutive rows into the 128-lane axis when possible so the p0/p3
    # streams are fully lane dense.  Contiguous reshape -> no copy.
    if K <= 128 and 128 % K == 0 and M % (128 // K) == 0:
        G = 128 // K
    else:
        # TODO(synk): zero-padding K to a divisor/multiple of 128 would keep the
        # fold at the cost of one copy of p0/p3; fall back to full-dim blocks.
        G = 1
    L = G * K
    Rp = M // G
    p0 = p0.reshape(Rp, L)
    p3 = p3.reshape(Rp, L)

    # Tiny inputs only: pad packed rows up to one sublane group (negligible copy)
    # so every block's row extent fits inside the arrays.
    if Rp < 8:
        rpad = 8 - Rp
        p0 = jnp.pad(p0, ((0, rpad), (0, 0)))
        p3 = jnp.pad(p3, ((0, rpad), (0, 0)))
        yt = jnp.pad(yt, (0, rpad * G))
        thr = jnp.pad(thr, (0, rpad * G), constant_values=jnp.nan)
        Rp, M = 8, 8 * G

    # Row tile: multiple of 8, <= Rp, capped at 1024 and by a ~8 MiB
    # double-buffered-input budget (2 streams x 2 buffers x tile).
    itemsize = jnp.dtype(p0.dtype).itemsize
    row_budget = max(8, (8 << 20) // (4 * L * itemsize))
    tm = min(1024, row_budget, (Rp // 8) * 8)
    tm = max(8, (tm // 8) * 8)
    n_tiles = -(-Rp // tm)

    # Side slab [yTrue | thr] is the ONLY stream padded to the grid extent
    # (tiny).  NaN thresholds on padded rows make every comparison False, so the
    # undefined contents of the partially out-of-bounds edge blocks of p0/p3
    # contribute no tp/fp.  (Assumes real thresholds are never NaN; a real-NaN
    # threshold row would also contribute 0, matching NaN-propagation semantics.)
    Rp_pad = n_tiles * tm
    spad = Rp_pad * G - M
    if spad:
        yt = jnp.pad(yt, (0, spad))
        thr = jnp.pad(thr, (0, spad), constant_values=jnp.nan)
    side = jnp.concatenate([yt.reshape(Rp_pad, G), thr.reshape(Rp_pad, G)], axis=-1)

    # bf16 inputs: keep product + selector in bf16 (VALU/MXU native on v6e/v7x);
    # f32 inputs: exact-precision MXU segment-sum.
    compute_dtype = jnp.bfloat16 if p0.dtype == jnp.bfloat16 else jnp.float32
    exact_dot = compute_dtype == jnp.float32
    # Block-diagonal selector: sel[l, g] = 1 iff l // K == g.
    sel = (jnp.arange(L, dtype=jnp.int32)[:, None] // K
           == jnp.arange(G, dtype=jnp.int32)[None, :]).astype(compute_dtype)

    kernel = functools.partial(_cmal_precision_kernel, G=G, direction=direction,
                               exact_dot=exact_dot)
    tp_out, fp_out = pl.pallas_call(
        kernel,
        out_shape=(jax.ShapeDtypeStruct((8, 128), jnp.float32),
                   jax.ShapeDtypeStruct((8, 128), jnp.float32)),
        grid=(n_tiles,),
        in_specs=[
            pl.BlockSpec((L, G), lambda i: (0, 0)),         # resident selector
            pl.BlockSpec((tm, L), lambda i: (i, 0)),        # p0 (unpadded stream)
            pl.BlockSpec((tm, L), lambda i: (i, 0)),        # p3 (unpadded stream)
            pl.BlockSpec((tm, 2 * G), lambda i: (i, 0)),    # [yTrue | thr]
        ],
        out_specs=(
            pl.BlockSpec((8, 128), lambda i: (0, 0)),
            pl.BlockSpec((8, 128), lambda i: (0, 0)),
        ),
        scratch_shapes=[pltpu.VMEM((1, G), jnp.float32),
                        pltpu.VMEM((1, G), jnp.float32)],
        compiler_params=pltpu.CompilerParams(
            dimension_semantics=("arbitrary",)),
    )(sel, p0, p3, side)

    return jnp.stack([tp_out[0, 0], fp_out[0, 0]])


class CMALPrecision:
    """JAX/Pallas port of the PyTorch CMALPrecision module (forward pass)."""

    def __init__(self, direction='above', batches=100, sample=0):
        self.direction = direction
        self.numBatches = batches
        # Each row's threshold comes from its own batch, so per-batch (tp, fp)
        # counts are immutable integers: cache counts instead of rescanning the
        # whole rolling window (and recompiling for growing concat shapes).
        # TODO(synk): raw batch tensors are not retained (only their counts);
        # observationally equivalent for forward().
        self.batches = []
        self.sampleNum = sample

    def forward(self, yPred, yTrue, thresholds, *args, **kwargs):
        p0 = jnp.asarray(yPred[0])
        p3 = jnp.asarray(yPred[3])
        thr_col = jnp.asarray(thresholds)[:, self.sampleNum]
        counts = _cmal_precision_counts(p0, p3, jnp.asarray(yTrue), thr_col,
                                        direction=self.direction)
        counts = jax.block_until_ready(counts)
        self.batches.append((float(counts[0]), float(counts[1])))
        if len(self.batches) > self.numBatches:
            self.batches = self.batches[1:]

        tp = sum(b[0] for b in self.batches)
        fp = sum(b[1] for b in self.batches)
        value = tp / (tp + fp + 1e-08)
        if not math.isfinite(value):   # nan_to_num(value, 0, 0, 0)
            value = 0.0
        return float(value)            # .item() semantics

    __call__ = forward


def _reference(p0, p3, yTrue, thr_col, direction):
    s = jnp.sum(p0 * p3, axis=-1)
    thr = thr_col[:, None]
    if direction == "below":
        tp = (s < thr) & (yTrue < thr)
        fp = (s <= thr) & (yTrue > thr)
    else:
        tp = (s >= thr) & (yTrue >= thr)
        fp = (s >= thr) & (yTrue < thr)
    tp = jnp.sum(tp.astype(jnp.float32))
    fp = jnp.sum(fp.astype(jnp.float32))
    val = tp / (tp + fp + 1e-08)
    return float(jnp.nan_to_num(val, nan=0.0, posinf=0.0, neginf=0.0))


if __name__ == "__main__":
    key = jax.random.PRNGKey(0)
    B, T, K, S = 2, 8, 32, 3
    ks = jax.random.split(key, 12)

    def make_batch(kk):
        yPred = tuple(jax.random.normal(kk[i], (B, T, K), jnp.float32) for i in range(4))
        yTrue = jax.random.normal(kk[4], (B, T), jnp.float32)
        thresholds = jax.random.normal(kk[5], (B, S), jnp.float32) * 0.1
        return yPred, yTrue, thresholds

    b1 = make_batch(ks[0:6])
    b2 = make_batch(ks[6:12])

    # direction='above', two calls -> rolling-window concatenation of both batches
    metric = CMALPrecision(direction="above", batches=100, sample=0)
    v1 = metric.forward(*b1)
    v2 = metric.forward(*b2)

    r1 = _reference(b1[0][0], b1[0][3], b1[1], b1[2][:, 0], "above")
    p0c = jnp.concatenate([b1[0][0], b2[0][0]], axis=0)
    p3c = jnp.concatenate([b1[0][3], b2[0][3]], axis=0)
    ytc = jnp.concatenate([b1[1], b2[1]], axis=0)
    thc = jnp.concatenate([b1[2], b2[2]], axis=0)[:, 0]
    r2 = _reference(p0c, p3c, ytc, thc, "above")
    assert abs(v1 - r1) < 1e-5, (v1, r1)
    assert abs(v2 - r2) < 1e-5, (v2, r2)

    # direction='below', different sample column
    metric_b = CMALPrecision(direction="below", batches=100, sample=1)
    v3 = metric_b.forward(*b1)
    r3 = _reference(b1[0][0], b1[0][3], b1[1], b1[2][:, 1], "below")
    assert abs(v3 - r3) < 1e-5, (v3, r3)

    print("KERNEL_OK")
</pallas_src>

<mosaic_0001>
module attributes {stable_mosaic.version = 11 : i64} {
  func.func @_cmal_precision_kernel(%arg0: i32, %arg1: memref<128x4xf32, #tpu.memory_space<vmem>>, %arg2: memref<8x128xf32, #tpu.memory_space<vmem>>, %arg3: memref<8x128xf32, #tpu.memory_space<vmem>>, %arg4: memref<8x8xf32, #tpu.memory_space<vmem>>, %arg5: memref<8x128xf32, #tpu.memory_space<vmem>>, %arg6: memref<8x128xf32, #tpu.memory_space<vmem>>, %arg7: memref<1x4xf32, #tpu.memory_space<vmem>>, %arg8: memref<1x4xf32, #tpu.memory_space<vmem>>) attributes {dimension_semantics = [#tpu.dimension_semantics<arbitrary>], iteration_bounds = array<i64: 1>, scalar_prefetch = 0 : i64, scratch_operands = 2 : i64, tpu.core_type = #tpu.core_type<tc>, window_params = [{pipeline_mode = #tpu.pipeline_mode<synchronous>, transform_indices = @transform_0, window_bounds = array<i64: 128, 4>}, {transform_indices = @transform_1, window_bounds = array<i64: 8, 128>}, {transform_indices = @transform_2, window_bounds = array<i64: 8, 128>}, {transform_indices = @transform_3, window_bounds = array<i64: 8, 8>}, {pipeline_mode = #tpu.pipeline_mode<synchronous>, transform_indices = @transform_4, window_bounds = array<i64: 8, 128>}, {pipeline_mode = #tpu.pipeline_mode<synchronous>, transform_indices = @transform_5, window_bounds = array<i64: 8, 128>}]} {
    %c0_i32 = arith.constant 0 : i32
    %0 = arith.cmpi eq, %arg0, %c0_i32 : i32
    %1 = arith.extui %0 : i1 to i32
    %c0_i32_0 = arith.constant 0 : i32
    %2 = arith.cmpi ne, %1, %c0_i32_0 : i32
    scf.if %2 {
      %cst_20 = arith.constant 0.000000e+00 : f32
      %33 = vector.broadcast %cst_20 : f32 to vector<1x4xf32>
      %c0_21 = arith.constant 0 : index
      %c0_22 = arith.constant 0 : index
      %34 = vector.load %arg7[%c0_21, %c0_22] : memref<1x4xf32, #tpu.memory_space<vmem>>, vector<1x4xf32>
      tpu.vector_store %arg7[%c0_21, %c0_22], %33 {strides = array<i32>} : memref<1x4xf32, #tpu.memory_space<vmem>>, vector<1x4xf32>,
      %cst_23 = arith.constant 0.000000e+00 : f32
      %35 = vector.broadcast %cst_23 : f32 to vector<1x4xf32>
      %c0_24 = arith.constant 0 : index
      %c0_25 = arith.constant 0 : index
      %36 = vector.load %arg8[%c0_24, %c0_25] : memref<1x4xf32, #tpu.memory_space<vmem>>, vector<1x4xf32>
      tpu.vector_store %arg8[%c0_24, %c0_25], %35 {strides = array<i32>} : memref<1x4xf32, #tpu.memory_space<vmem>>, vector<1x4xf32>,
      %cst_26 = arith.constant 0.000000e+00 : f32
      %37 = vector.broadcast %cst_26 : f32 to vector<8x128xf32>
      %c0_27 = arith.constant 0 : index
      %c0_28 = arith.constant 0 : index
      %38 = vector.load %arg5[%c0_27, %c0_28] : memref<8x128xf32, #tpu.memory_space<vmem>>, vector<8x128xf32>
      tpu.vector_store %arg5[%c0_27, %c0_28], %37 {strides = array<i32>} : memref<8x128xf32, #tpu.memory_space<vmem>>, vector<8x128xf32>,
      %cst_29 = arith.constant 0.000000e+00 : f32
      %39 = vector.broadcast %cst_29 : f32 to vector<8x128xf32>
      %c0_30 = arith.constant 0 : index
      %c0_31 = arith.constant 0 : index
      %40 = vector.load %arg6[%c0_30, %c0_31] : memref<8x128xf32, #tpu.memory_space<vmem>>, vector<8x128xf32>
      tpu.vector_store %arg6[%c0_30, %c0_31], %39 {strides = array<i32>} : memref<8x128xf32, #tpu.memory_space<vmem>>, vector<8x128xf32>,
    } else {
    }
    %c0 = arith.constant 0 : index
    %c0_1 = arith.constant 0 : index
    %3 = vector.load %arg2[%c0, %c0_1] : memref<8x128xf32, #tpu.memory_space<vmem>>, vector<8x128xf32>
    %c0_2 = arith.constant 0 : index
    %c0_3 = arith.constant 0 : index
    %4 = vector.load %arg3[%c0_2, %c0_3] : memref<8x128xf32, #tpu.memory_space<vmem>>, vector<8x128xf32>
    %5 = arith.mulf %3, %4 : vector<8x128xf32>
    %c0_4 = arith.constant 0 : index
    %c0_5 = arith.constant 0 : index
    %6 = vector.load %arg1[%c0_4, %c0_5] : memref<128x4xf32, #tpu.memory_space<vmem>>, vector<128x4xf32>
    %cst = arith.constant dense<0.000000e+00> : vector<8x4xf32>
    %7 = tpu.matmul %5, %6, %cst {dimension_numbers = #tpu.dot_dimension_numbers<[1], [0], [0], [1], [0, 0, 1, 1], [], []>, precision = #tpu.contract_precision<fp32>} : vector<8x128xf32>, vector<128x4xf32>, vector<8x4xf32> -> vector<8x4xf32>
    %c0_6 = arith.constant 0 : index
    %c0_7 = arith.constant 0 : index
    %8 = vector.load %arg4[%c0_6, %c0_7] : memref<8x8xf32, #tpu.memory_space<vmem>>, vector<8x8xf32>
    %9 = vector.extract_strided_slice %8 {offsets = [0, 0], sizes = [8, 4], strides = [1, 1]} : vector<8x8xf32> to vector<8x4xf32>
    %10 = vector.extract_strided_slice %8 {offsets = [0, 4], sizes = [8, 4], strides = [1, 1]} : vector<8x8xf32> to vector<8x4xf32>
    %11 = arith.cmpf oge, %7, %10 : vector<8x4xf32>
    %12 = arith.cmpf oge, %9, %10 : vector<8x4xf32>
    %13 = arith.andi %11, %12 : vector<8x4xi1>
    %14 = arith.cmpf olt, %9, %10 : vector<8x4xf32>
    %15 = arith.andi %11, %14 : vector<8x4xi1>
    %c0_8 = arith.constant 0 : index
    %c0_9 = arith.constant 0 : index
    %16 = vector.load %arg7[%c0_8, %c0_9] : memref<1x4xf32, #tpu.memory_space<vmem>>, vector<1x4xf32>
    %17 = arith.extui %13 : vector<8x4xi1> to vector<8x4xi32>
    %18 = arith.sitofp %17 : vector<8x4xi32> to vector<8x4xf32>
    %cst_10 = arith.constant dense<0.000000e+00> : vector<4xf32>
    %19 = vector.multi_reduction <add>, %18, %cst_10 [0] : vector<8x4xf32> to vector<4xf32>
    %20 = vector.shape_cast %19 : vector<4xf32> to vector<1x4xf32>
    %21 = arith.addf %16, %20 : vector<1x4xf32>
    %c0_11 = arith.constant 0 : index
    %c0_12 = arith.constant 0 : index
    %22 = vector.load %arg7[%c0_11, %c0_12] : memref<1x4xf32, #tpu.memory_space<vmem>>, vector<1x4xf32>
    tpu.vector_store %arg7[%c0_11, %c0_12], %21 {strides = array<i32>} : memref<1x4xf32, #tpu.memory_space<vmem>>, vector<1x4xf32>,
    %c0_13 = arith.constant 0 : index
    %c0_14 = arith.constant 0 : index
    %23 = vector.load %arg8[%c0_13, %c0_14] : memref<1x4xf32, #tpu.memory_space<vmem>>, vector<1x4xf32>
    %24 = arith.extui %15 : vector<8x4xi1> to vector<8x4xi32>
    %25 = arith.sitofp %24 : vector<8x4xi32> to vector<8x4xf32>
    %cst_15 = arith.constant dense<0.000000e+00> : vector<4xf32>
    %26 = vector.multi_reduction <add>, %25, %cst_15 [0] : vector<8x4xf32> to vector<4xf32>
    %27 = vector.shape_cast %26 : vector<4xf32> to vector<1x4xf32>
    %28 = arith.addf %23, %27 : vector<1x4xf32>
    %c0_16 = arith.constant 0 : index
    %c0_17 = arith.constant 0 : index
    %29 = vector.load %arg8[%c0_16, %c0_17] : memref<1x4xf32, #tpu.memory_space<vmem>>, vector<1x4xf32>
    tpu.vector_store %arg8[%c0_16, %c0_17], %28 {strides = array<i32>} : memref<1x4xf32, #tpu.memory_space<vmem>>, vector<1x4xf32>,
    %c0_i32_18 = arith.constant 0 : i32
    %30 = arith.cmpi eq, %arg0, %c0_i32_18 : i32
    %31 = arith.extui %30 : i1 to i32
    %c0_i32_19 = arith.constant 0 : i32
    %32 = arith.cmpi ne, %31, %c0_i32_19 : i32
    scf.if %32 {
      %cst_20 = arith.constant 0.000000e+00 : f32
      %33 = vector.broadcast %cst_20 : f32 to vector<8x128xf32>
      %c0_21 = arith.constant 0 : index
      %c0_22 = arith.constant 0 : index
      %34 = vector.load %arg7[%c0_21, %c0_22] : memref<1x4xf32, #tpu.memory_space<vmem>>, vector<1x4xf32>
      %35 = vector.shape_cast %34 : vector<1x4xf32> to vector<1x1x4xf32>
      %cst_23 = arith.constant dense<0.000000e+00> : vector<1xf32>
      %36 = vector.multi_reduction <add>, %35, %cst_23 [1, 2] : vector<1x1x4xf32> to vector<1xf32>
      %37 = vector.shape_cast %36 : vector<1xf32> to vector<1x1x1xf32>
      %38 = vector.extract %37[0, 0, 0] : f32 from vector<1x1x1xf32>
      %39 = vector.broadcast %38 : f32 to vector<8x128xf32>
      %40 = arith.addf %33, %39 : vector<8x128xf32>
      %c0_24 = arith.constant 0 : index
      %c0_25 = arith.constant 0 : index
      %41 = vector.load %arg5[%c0_24, %c0_25] : memref<8x128xf32, #tpu.memory_space<vmem>>, vector<8x128xf32>
      tpu.vector_store %arg5[%c0_24, %c0_25], %40 {strides = array<i32>} : memref<8x128xf32, #tpu.memory_space<vmem>>, vector<8x128xf32>,
      %cst_26 = arith.constant 0.000000e+00 : f32
      %42 = vector.broadcast %cst_26 : f32 to vector<8x128xf32>
      %c0_27 = arith.constant 0 : index
      %c0_28 = arith.constant 0 : index
      %43 = vector.load %arg8[%c0_27, %c0_28] : memref<1x4xf32, #tpu.memory_space<vmem>>, vector<1x4xf32>
      %44 = vector.shape_cast %43 : vector<1x4xf32> to vector<1x1x4xf32>
      %cst_29 = arith.constant dense<0.000000e+00> : vector<1xf32>
      %45 = vector.multi_reduction <add>, %44, %cst_29 [1, 2] : vector<1x1x4xf32> to vector<1xf32>
      %46 = vector.shape_cast %45 : vector<1xf32> to vector<1x1x1xf32>
      %47 = vector.extract %46[0, 0, 0] : f32 from vector<1x1x1xf32>
      %48 = vector.broadcast %47 : f32 to vector<8x128xf32>
      %49 = arith.addf %42, %48 : vector<8x128xf32>
      %c0_30 = arith.constant 0 : index
      %c0_31 = arith.constant 0 : index
      %50 = vector.load %arg6[%c0_30, %c0_31] : memref<8x128xf32, #tpu.memory_space<vmem>>, vector<8x128xf32>
      tpu.vector_store %arg6[%c0_30, %c0_31], %49 {strides = array<i32>} : memref<8x128xf32, #tpu.memory_space<vmem>>, vector<8x128xf32>,
    } else {
    }
    return
  }
  func.func @transform_0(%arg0: i32) -> (i32, i32) {
    %c0_i32 = arith.constant 0 : i32
    %c0_i32_0 = arith.constant 0 : i32
    %c0_i32_1 = arith.constant 0 : i32
    return %c0_i32, %c0_i32_0 : i32, i32
  }
  func.func @transform_1(%arg0: i32) -> (i32, i32) {
    %c0_i32 = arith.constant 0 : i32
    %c0_i32_0 = arith.constant 0 : i32
    return %arg0, %c0_i32 : i32, i32
  }
  func.func @transform_2(%arg0: i32) -> (i32, i32) {
    %c0_i32 = arith.constant 0 : i32
    %c0_i32_0 = arith.constant 0 : i32
    return %arg0, %c0_i32 : i32, i32
  }
  func.func @transform_3(%arg0: i32) -> (i32, i32) {
    %c0_i32 = arith.constant 0 : i32
    %c0_i32_0 = arith.constant 0 : i32
    return %arg0, %c0_i32 : i32, i32
  }
  func.func @transform_4(%arg0: i32) -> (i32, i32) {
    %c0_i32 = arith.constant 0 : i32
    %c0_i32_0 = arith.constant 0 : i32
    %c0_i32_1 = arith.constant 0 : i32
    return %c0_i32, %c0_i32_0 : i32, i32
  }
  func.func @transform_5(%arg0: i32) -> (i32, i32) {
    %c0_i32 = arith.constant 0 : i32
    %c0_i32_0 = arith.constant 0 : i32
    %c0_i32_1 = arith.constant 0 : i32
    return %c0_i32, %c0_i32_0 : i32, i32
  }
}

</mosaic_0001>

<llo_original>
// kernel: _cmal_precision_counts.1
$region0: #{_cmal_precision_counts.1}
  #allocation0 [shape = 'u32[]', space=smem, size = 0x4, offset = 0x4, fixed_abs, tag = 'smem constant byte address 0x4 - core index']
  #allocation1 [shape = 'u32[72,128]{1,0:T(1,128)}', space=vmem, size = 0x9000, scoped, tag = 'internal scratch']
  #allocation2 [shape = 'f32[1,4]{1,0:T(1,128)}', space=vmem, size = 0x200, scoped, tag = 'scratch operand']
  #allocation3 [shape = 'f32[1,4]{1,0:T(1,128)}', space=vmem, size = 0x200, scoped, tag = 'scratch operand']
  %s0 = inlined_call_operand.vmem [shape: f32[128,4], index: 0, kind: input, shape index: {}]
  %s1 = inlined_call_operand.vmem [shape: f32[8,128], index: 1, kind: input, shape index: {}]
  %s2 = inlined_call_operand.vmem [shape: f32[8,128], index: 2, kind: input, shape index: {}]
  %s3 = inlined_call_operand.vmem [shape: f32[8,8], index: 3, kind: input, shape index: {}]
  %s4 = inlined_call_operand.vmem [shape: f32[8,128], index: 4, kind: output, shape index: {0}]
  %s5 = inlined_call_operand.vmem [shape: f32[8,128], index: 5, kind: output, shape index: {1}]
  %6 = xla_tuple %s4, %s5
  %s7 = sld [smem:[#allocation0]]
  $region42: #{_cmal_precision_counts.1} parent=0
    _
  %s9 = ssub.s32 1, %s7
  %s10 = scalar_select 0, %s9, %s7
  // Predicated region
  $region2: #{_cmal_precision_counts.1} parent=0 // pred_check
    _
  $region3: #{_cmal_precision_counts.1} parent=0 // pred_check_branch
    %12 = sbr.rel (0) target = $region5
  $region4: #{_cmal_precision_counts.1} parent=0 // pred_region
    _
  $region5: #{_cmal_precision_counts.1} parent=0 // pred_fallthru
    _
  // Predicated region
  $region6: #{_cmal_precision_counts.1} parent=0 // pred_check
    _
  $region7: #{_cmal_precision_counts.1} parent=0 // pred_check_branch
    %14 = sbr.rel (0) target = $region9
  $region8: #{_cmal_precision_counts.1} parent=0 // pred_region
    _
  $region9: #{_cmal_precision_counts.1} parent=0 // pred_fallthru
    _
  // Predicated region
  $region10: #{_cmal_precision_counts.1} parent=0 // pred_check
    _
  $region11: #{_cmal_precision_counts.1} parent=0 // pred_check_branch
    %16 = sbr.rel (0) target = $region13
  $region12: #{_cmal_precision_counts.1} parent=0 // pred_region
    _
  $region13: #{_cmal_precision_counts.1} parent=0 // pred_fallthru
    _
  // Predicated region
  $region14: #{_cmal_precision_counts.1} parent=0 // pred_check
    _
  $region15: #{_cmal_precision_counts.1} parent=0 // pred_check_branch
    %18 = sbr.rel (0) target = $region17
  $region16: #{_cmal_precision_counts.1} parent=0 // pred_region
    _
  $region17: #{_cmal_precision_counts.1} parent=0 // pred_fallthru
    _
  %p19 = scmp.eq.s32.totalorder 0, 0
  // Predicated region
  $region18: #{_cmal_precision_counts.1} parent=0 // pred_check
    %p20 = pneg %p19
  $region19: #{_cmal_precision_counts.1} parent=0 // pred_check_branch
    %22 = sbr.rel (%p20) target = $region21
  $region20: #{_cmal_precision_counts.1} parent=0 // pred_region
    %vm23 = vcmask 24576
    %24 = vst.msk [vmem:[#allocation2] sm:$0x1] %vm23, 0.0
    %25 = vst.msk [vmem:[#allocation3] sm:$0x1] %vm23, 0.0
    %26 = vst [vmem:[%s4] sm:$0xff] 0.0
    %27 = vst [vmem:[%s5] sm:$0xff] 0.0
  $region21: #{_cmal_precision_counts.1} parent=0 // pred_fallthru
    _
  %v28 = vld [vmem:[%s1] sm:$0xff]
  %v29 = vld [vmem:[%s2] sm:$0xff]
  %v30 = vmul.f32 %v28, %v29
  %v31 = vld [vmem:[%s0] sm:$0xff]
  %v32 = vld [vmem:[%s0 + $0x8] sm:$0xff]
  %v33 = vld [vmem:[%s0 + $0x10] sm:$0xff]
  %v34 = vld [vmem:[%s0 + $0x18] sm:$0xff]
  %v35 = vld [vmem:[%s0 + $0x20] sm:$0xff]
  %v36 = vld [vmem:[%s0 + $0x28] sm:$0xff]
  %v37 = vld [vmem:[%s0 + $0x30] sm:$0xff]
  %v38 = vld [vmem:[%s0 + $0x38] sm:$0xff]
  %v39 = vld [vmem:[%s0 + $0x40] sm:$0xff]
  %v40 = vld [vmem:[%s0 + $0x48] sm:$0xff]
  %v41 = vld [vmem:[%s0 + $0x50] sm:$0xff]
  %v42 = vld [vmem:[%s0 + $0x58] sm:$0xff]
  %v43 = vld [vmem:[%s0 + $0x60] sm:$0xff]
  %v44 = vld [vmem:[%s0 + $0x68] sm:$0xff]
  %v45 = vld [vmem:[%s0 + $0x70] sm:$0xff]
  %v46 = vld [vmem:[%s0 + $0x78] sm:$0xff]
  %v47 = vand.u32 %v46, 4294901760
  %48 = vmatpush.msra.mxu0 %v47
  %v49 = vand.u32 %v45, 4294901760
  %50 = vmatpush.msra.mxu0 %v49
  %v51 = vand.u32 %v44, 4294901760
  %52 = vmatpush.msra.mxu0 %v51
  %v53 = vand.u32 %v43, 4294901760
  %54 = vmatpush.msra.mxu0 %v53
  %v55 = vand.u32 %v42, 4294901760
  %56 = vmatpush.msra.mxu0 %v55
  %v57 = vand.u32 %v41, 4294901760
  %58 = vmatpush.msra.mxu0 %v57
  %v59 = vand.u32 %v40, 4294901760
  %60 = vmatpush.msra.mxu0 %v59
  %v61 = vand.u32 %v39, 4294901760
  %62 = vmatpush.msra.mxu0 %v61
  %v63 = vand.u32 %v38, 4294901760
  %64 = vmatpush.msra.mxu0 %v63
  %v65 = vand.u32 %v37, 4294901760
  %66 = vmatpush.msra.mxu0 %v65
  %v67 = vand.u32 %v36, 4294901760
  %68 = vmatpush.msra.mxu0 %v67
  %v69 = vand.u32 %v35, 4294901760
  %70 = vmatpush.msra.mxu0 %v69
  %v71 = vand.u32 %v34, 4294901760
  %72 = vmatpush.msra.mxu0 %v71
  %v73 = vand.u32 %v33, 4294901760
  %74 = vmatpush.msra.mxu0 %v73
  %v75 = vand.u32 %v32, 4294901760
  %76 = vmatpush.msra.mxu0 %v75
  %v77 = vand.u32 %v31, 4294901760
  %78 = vmatpush.msra.mxu0 %v77
  %v79 = vand.u32 %v30, 4294901760
  %v80 = vsub.f32 %v30, %v79
  %v81 = vand.u32 %v80, 4294901760
  %v82 = vsub.f32 %v80, %v81
  %v83 = vand.u32 %v82, 4294901760
  %84 = vmatmul.f32.gmra.mxu0 %v83
  %v85 = vpop.f32.mrf.mxu0
  %v86 = vadd.f32 0.0, %v85
  %87 = vdwg.mxu0
  %v88 = vand.u32 %v46, 4294901760
  %v89 = vsub.f32 %v46, %v88
  %v90 = vand.u32 %v89, 4294901760
  %v91 = vsub.f32 %v89, %v90
  %v92 = vand.u32 %v91, 4294901760
  %93 = vmatpush.msra.mxu0 %v92
  %v94 = vand.u32 %v45, 4294901760
  %v95 = vsub.f32 %v45, %v94
  %v96 = vand.u32 %v95, 4294901760
  %v97 = vsub.f32 %v95, %v96
  %v98 = vand.u32 %v97, 4294901760
  %99 = vmatpush.msra.mxu0 %v98
  %v100 = vand.u32 %v44, 4294901760
  %v101 = vsub.f32 %v44, %v100
  %v102 = vand.u32 %v101, 4294901760
  %v103 = vsub.f32 %v101, %v102
  %v104 = vand.u32 %v103, 4294901760
  %105 = vmatpush.msra.mxu0 %v104
  %v106 = vand.u32 %v43, 4294901760
  %v107 = vsub.f32 %v43, %v106
  %v108 = vand.u32 %v107, 4294901760
  %v109 = vsub.f32 %v107, %v108
  %v110 = vand.u32 %v109, 4294901760
  %111 = vmatpush.msra.mxu0 %v110
  %v112 = vand.u32 %v42, 4294901760
  %v113 = vsub.f32 %v42, %v112
  %v114 = vand.u32 %v113, 4294901760
  %v115 = vsub.f32 %v113, %v114
  %v116 = vand.u32 %v115, 4294901760
  %117 = vmatpush.msra.mxu0 %v116
  %v118 = vand.u32 %v41, 4294901760
  %v119 = vsub.f32 %v41, %v118
  %v120 = vand.u32 %v119, 4294901760
  %v121 = vsub.f32 %v119, %v120
  %v122 = vand.u32 %v121, 4294901760
  %123 = vmatpush.msra.mxu0 %v122
  %v124 = vand.u32 %v40, 4294901760
  %v125 = vsub.f32 %v40, %v124
  %v126 = vand.u32 %v125, 4294901760
  %v127 = vsub.f32 %v125, %v126
  %v128 = vand.u32 %v127, 4294901760
  %129 = vmatpush.msra.mxu0 %v128
  %v130 = vand.u32 %v39, 4294901760
  %v131 = vsub.f32 %v39, %v130
  %v132 = vand.u32 %v131, 4294901760
  %v133 = vsub.f32 %v131, %v132
  %v134 = vand.u32 %v133, 4294901760
  %135 = vmatpush.msra.mxu0 %v134
  %v136 = vand.u32 %v38, 4294901760
  %v137 = vsub.f32 %v38, %v136
  %v138 = vand.u32 %v137, 4294901760
  %v139 = vsub.f32 %v137, %v138
  %v140 = vand.u32 %v139, 4294901760
  %141 = vmatpush.msra.mxu0 %v140
  %v142 = vand.u32 %v37, 4294901760
  %v143 = vsub.f32 %v37, %v142
  %v144 = vand.u32 %v143, 4294901760
  %v145 = vsub.f32 %v143, %v144
  %v146 = vand.u32 %v145, 4294901760
  %147 = vmatpush.msra.mxu0 %v146
  %v148 = vand.u32 %v36, 4294901760
  %v149 = vsub.f32 %v36, %v148
  %v150 = vand.u32 %v149, 4294901760
  %v151 = vsub.f32 %v149, %v150
  %v152 = vand.u32 %v151, 4294901760
  %153 = vmatpush.msra.mxu0 %v152
  %v154 = vand.u32 %v35, 4294901760
  %v155 = vsub.f32 %v35, %v154
  %v156 = vand.u32 %v155, 4294901760
  %v157 = vsub.f32 %v155, %v156
  %v158 = vand.u32 %v157, 4294901760
  %159 = vmatpush.msra.mxu0 %v158
  %v160 = vand.u32 %v34, 4294901760
  %v161 = vsub.f32 %v34, %v160
  %v162 = vand.u32 %v161, 4294901760
  %v163 = vsub.f32 %v161, %v162
  %v164 = vand.u32 %v163, 4294901760
  %165 = vmatpush.msra.mxu0 %v164
  %v166 = vand.u32 %v33, 4294901760
  %v167 = vsub.f32 %v33, %v166
  %v168 = vand.u32 %v167, 4294901760
  %v169 = vsub.f32 %v167, %v168
  %v170 = vand.u32 %v169, 4294901760
  %171 = vmatpush.msra.mxu0 %v170
  %v172 = vand.u32 %v32, 4294901760
  %v173 = vsub.f32 %v32, %v172
  %v174 = vand.u32 %v173, 4294901760
  %v175 = vsub.f32 %v173, %v174
  %v176 = vand.u32 %v175, 4294901760
  %177 = vmatpush.msra.mxu0 %v176
  %v178 = vand.u32 %v31, 4294901760
  %v179 = vsub.f32 %v31, %v178
  %v180 = vand.u32 %v179, 4294901760
  %v181 = vsub.f32 %v179, %v180
  %v182 = vand.u32 %v181, 4294901760
  %183 = vmatpush.msra.mxu0 %v182
  %v184 = vand.u32 %v30, 4294901760
  %185 = vmatmul.f32.gmra.mxu0 %v184
  %v186 = vpop.f32.mrf.mxu0
  %v187 = vadd.f32 %v86, %v186
  %188 = vdwg.mxu0
  %v189 = vand.u32 %v46, 4294901760
  %v190 = vsub.f32 %v46, %v189
  %191 = vmatpush.msra.mxu0 %v190
  %v192 = vand.u32 %v45, 4294901760
  %v193 = vsub.f32 %v45, %v192
  %194 = vmatpush.msra.mxu0 %v193
  %v195 = vand.u32 %v44, 4294901760
  %v196 = vsub.f32 %v44, %v195
  %197 = vmatpush.msra.mxu0 %v196
  %v198 = vand.u32 %v43, 4294901760
  %v199 = vsub.f32 %v43, %v198
  %200 = vmatpush.msra.mxu0 %v199
  %v201 = vand.u32 %v42, 4294901760
  %v202 = vsub.f32 %v42, %v201
  %203 = vmatpush.msra.mxu0 %v202
  %v204 = vand.u32 %v41, 4294901760
  %v205 = vsub.f32 %v41, %v204
  %206 = vmatpush.msra.mxu0 %v205
  %v207 = vand.u32 %v40, 4294901760
  %v208 = vsub.f32 %v40, %v207
  %209 = vmatpush.msra.mxu0 %v208
  %v210 = vand.u32 %v39, 4294901760
  %v211 = vsub.f32 %v39, %v210
  %212 = vmatpush.msra.mxu0 %v211
  %v213 = vand.u32 %v38, 4294901760
  %v214 = vsub.f32 %v38, %v213
  %215 = vmatpush.msra.mxu0 %v214
  %v216 = vand.u32 %v37, 4294901760
  %v217 = vsub.f32 %v37, %v216
  %218 = vmatpush.msra.mxu0 %v217
  %v219 = vand.u32 %v36, 4294901760
  %v220 = vsub.f32 %v36, %v219
  %221 = vmatpush.msra.mxu0 %v220
  %v222 = vand.u32 %v35, 4294901760
  %v223 = vsub.f32 %v35, %v222
  %224 = vmatpush.msra.mxu0 %v223
  %v225 = vand.u32 %v34, 4294901760
  %v226 = vsub.f32 %v34, %v225
  %227 = vmatpush.msra.mxu0 %v226
  %v228 = vand.u32 %v33, 4294901760
  %v229 = vsub.f32 %v33, %v228
  %230 = vmatpush.msra.mxu0 %v229
  %v231 = vand.u32 %v32, 4294901760
  %v232 = vsub.f32 %v32, %v231
  %233 = vmatpush.msra.mxu0 %v232
  %v234 = vand.u32 %v31, 4294901760
  %v235 = vsub.f32 %v31, %v234
  %236 = vmatpush.msra.mxu0 %v235
  %v237 = vand.u32 %v30, 4294901760
  %v238 = vsub.f32 %v30, %v237
  %239 = vmatmul.f32.gmra.mxu0 %v238
  %v240 = vpop.f32.mrf.mxu0
  %v241 = vadd.f32 %v187, %v240
  %242 = vdwg.mxu0
  %v243 = vand.u32 %v46, 4294901760
  %244 = vmatpush.msra.mxu0 %v243
  %v245 = vand.u32 %v45, 4294901760
  %246 = vmatpush.msra.mxu0 %v245
  %v247 = vand.u32 %v44, 4294901760
  %248 = vmatpush.msra.mxu0 %v247
  %v249 = vand.u32 %v43, 4294901760
  %250 = vmatpush.msra.mxu0 %v249
  %v251 = vand.u32 %v42, 4294901760
  %252 = vmatpush.msra.mxu0 %v251
  %v253 = vand.u32 %v41, 4294901760
  %254 = vmatpush.msra.mxu0 %v253
  %v255 = vand.u32 %v40, 4294901760
  %256 = vmatpush.msra.mxu0 %v255
  %v257 = vand.u32 %v39, 4294901760
  %258 = vmatpush.msra.mxu0 %v257
  %v259 = vand.u32 %v38, 4294901760
  %260 = vmatpush.msra.mxu0 %v259
  %v261 = vand.u32 %v37, 4294901760
  %262 = vmatpush.msra.mxu0 %v261
  %v263 = vand.u32 %v36, 4294901760
  %264 = vmatpush.msra.mxu0 %v263
  %v265 = vand.u32 %v35, 4294901760
  %266 = vmatpush.msra.mxu0 %v265
  %v267 = vand.u32 %v34, 4294901760
  %268 = vmatpush.msra.mxu0 %v267
  %v269 = vand.u32 %v33, 4294901760
  %270 = vmatpush.msra.mxu0 %v269
  %v271 = vand.u32 %v32, 4294901760
  %272 = vmatpush.msra.mxu0 %v271
  %v273 = vand.u32 %v31, 4294901760
  %274 = vmatpush.msra.mxu0 %v273
  %v275 = vand.u32 %v30, 4294901760
  %v276 = vsub.f32 %v30, %v275
  %v277 = vand.u32 %v276, 4294901760
  %278 = vmatmul.f32.gmra.mxu0 %v277
  %v279 = vpop.f32.mrf.mxu0
  %v280 = vadd.f32 %v241, %v279
  %281 = vdwg.mxu0
  %v282 = vand.u32 %v46, 4294901760
  %v283 = vsub.f32 %v46, %v282
  %v284 = vand.u32 %v283, 4294901760
  %285 = vmatpush.msra.mxu0 %v284
  %v286 = vand.u32 %v45, 4294901760
  %v287 = vsub.f32 %v45, %v286
  %v288 = vand.u32 %v287, 4294901760
  %289 = vmatpush.msra.mxu0 %v288
  %v290 = vand.u32 %v44, 4294901760
  %v291 = vsub.f32 %v44, %v290
  %v292 = vand.u32 %v291, 4294901760
  %293 = vmatpush.msra.mxu0 %v292
  %v294 = vand.u32 %v43, 4294901760
  %v295 = vsub.f32 %v43, %v294
  %v296 = vand.u32 %v295, 4294901760
  %297 = vmatpush.msra.mxu0 %v296
  %v298 = vand.u32 %v42, 4294901760
  %v299 = vsub.f32 %v42, %v298
  %v300 = vand.u32 %v299, 4294901760
  %301 = vmatpush.msra.mxu0 %v300
  %v302 = vand.u32 %v41, 4294901760
  %v303 = vsub.f32 %v41, %v302
  %v304 = vand.u32 %v303, 4294901760
  %305 = vmatpush.msra.mxu0 %v304
  %v306 = vand.u32 %v40, 4294901760
  %v307 = vsub.f32 %v40, %v306
  %v308 = vand.u32 %v307, 4294901760
  %309 = vmatpush.msra.mxu0 %v308
  %v310 = vand.u32 %v39, 4294901760
  %v311 = vsub.f32 %v39, %v310
  %v312 = vand.u32 %v311, 4294901760
  %313 = vmatpush.msra.mxu0 %v312
  %v314 = vand.u32 %v38, 4294901760
  %v315 = vsub.f32 %v38, %v314
  %v316 = vand.u32 %v315, 4294901760
  %317 = vmatpush.msra.mxu0 %v316
  %v318 = vand.u32 %v37, 4294901760
  %v319 = vsub.f32 %v37, %v318
  %v320 = vand.u32 %v319, 4294901760
  %321 = vmatpush.msra.mxu0 %v320
  %v322 = vand.u32 %v36, 4294901760
  %v323 = vsub.f32 %v36, %v322
  %v324 = vand.u32 %v323, 4294901760
  %325 = vmatpush.msra.mxu0 %v324
  %v326 = vand.u32 %v35, 4294901760
  %v327 = vsub.f32 %v35, %v326
  %v328 = vand.u32 %v327, 4294901760
  %329 = vmatpush.msra.mxu0 %v328
  %v330 = vand.u32 %v34, 4294901760
  %v331 = vsub.f32 %v34, %v330
  %v332 = vand.u32 %v331, 4294901760
  %333 = vmatpush.msra.mxu0 %v332
  %v334 = vand.u32 %v33, 4294901760
  %v335 = vsub.f32 %v33, %v334
  %v336 = vand.u32 %v335, 4294901760
  %337 = vmatpush.msra.mxu0 %v336
  %v338 = vand.u32 %v32, 4294901760
  %v339 = vsub.f32 %v32, %v338
  %v340 = vand.u32 %v339, 4294901760
  %341 = vmatpush.msra.mxu0 %v340
  %v342 = vand.u32 %v31, 4294901760
  %v343 = vsub.f32 %v31, %v342
  %v344 = vand.u32 %v343, 4294901760
  %345 = vmatpush.msra.mxu0 %v344
  %v346 = vand.u32 %v30, 4294901760
  %347 = vmatmul.f32.gmra.mxu0 %v346
  %v348 = vpop.f32.mrf.mxu0
  %v349 = vadd.f32 %v280, %v348
  %350 = vdwg.mxu0
  %v351 = vand.u32 %v46, 4294901760
  %352 = vmatpush.msra.mxu0 %v351
  %v353 = vand.u32 %v45, 4294901760
  %354 = vmatpush.msra.mxu0 %v353
  %v355 = vand.u32 %v44, 4294901760
  %356 = vmatpush.msra.mxu0 %v355
  %v357 = vand.u32 %v43, 4294901760
  %358 = vmatpush.msra.mxu0 %v357
  %v359 = vand.u32 %v42, 4294901760
  %360 = vmatpush.msra.mxu0 %v359
  %v361 = vand.u32 %v41, 4294901760
  %362 = vmatpush.msra.mxu0 %v361
  %v363 = vand.u32 %v40, 4294901760
  %364 = vmatpush.msra.mxu0 %v363
  %v365 = vand.u32 %v39, 4294901760
  %366 = vmatpush.msra.mxu0 %v365
  %v367 = vand.u32 %v38, 4294901760
  %368 = vmatpush.msra.mxu0 %v367
  %v369 = vand.u32 %v37, 4294901760
  %370 = vmatpush.msra.mxu0 %v369
  %v371 = vand.u32 %v36, 4294901760
  %372 = vmatpush.msra.mxu0 %v371
  %v373 = vand.u32 %v35, 4294901760
  %374 = vmatpush.msra.mxu0 %v373
  %v375 = vand.u32 %v34, 4294901760
  %376 = vmatpush.msra.mxu0 %v375
  %v377 = vand.u32 %v33, 4294901760
  %378 = vmatpush.msra.mxu0 %v377
  %v379 = vand.u32 %v32, 4294901760
  %380 = vmatpush.msra.mxu0 %v379
  %v381 = vand.u32 %v31, 4294901760
  %382 = vmatpush.msra.mxu0 %v381
  %v383 = vand.u32 %v30, 4294901760
  %384 = vmatmul.f32.gmra.mxu0 %v383
  %v385 = vpop.f32.mrf.mxu0
  %v386 = vadd.f32 %v349, %v385
  %387 = vdwg.mxu0
  %v388 = vld [vmem:[%s3] sm:$0xff]
  %390 = vrot.lane.b32.xlu0 %v388, 124
  %v391 = vpop.permute.xlu0 %390
  %vm393 = vcmp.ge.f32.partialorder %v386, %v391
  %vm394 = vcmp.ge.f32.partialorder %v388, %v391
  %vm395 = vmand %vm393, %vm394
  %vm396 = vcmp.lt.f32.partialorder %v388, %v391
  %vm397 = vmand %vm393, %vm396
  %v398 = vld [vmem:[#allocation2] sm:$0x1]
  %v399 = vsel %vm395, 1, 0
  %v400 = vcvt.s32.f32 %v399
  %vm401 = vcmask 31744
  %v402 = vsel %vm401, %v400, 0.0
  %v403 = vrot.slane %v402, 4
  %v404 = vadd.f32 %v402, %v403
  %v405 = vrot.slane %v404, 2
  %v406 = vadd.f32 %v404, %v405
  %v407 = vrot.slane %v406, 1
  %v408 = vadd.f32 %v406, %v407
  %v409 = vadd.f32 %v398, %v408
  %vm410 = vcmask 24576
  %411 = vst.msk [vmem:[#allocation2] sm:$0x1] %vm410, %v409
  %v412 = vld [vmem:[#allocation3] sm:$0x1]
  %v413 = vsel %vm397, 1, 0
  %v414 = vcvt.s32.f32 %v413
  %v415 = vsel %vm401, %v414, 0.0
  %v416 = vrot.slane %v415, 4
  %v417 = vadd.f32 %v415, %v416
  %v418 = vrot.slane %v417, 2
  %v419 = vadd.f32 %v417, %v418
  %v420 = vrot.slane %v419, 1
  %v421 = vadd.f32 %v419, %v420
  %v422 = vadd.f32 %v412, %v421
  %423 = vst.msk [vmem:[#allocation3] sm:$0x1] %vm410, %v422
  // Predicated region
  $region22: #{_cmal_precision_counts.1} parent=0 // pred_check
    %p424 = pneg %p19
  $region23: #{_cmal_precision_counts.1} parent=0 // pred_check_branch
    %426 = sbr.rel (%p424) target = $region25
  $region24: #{_cmal_precision_counts.1} parent=0 // pred_region
    %v427 = vld [vmem:[#allocation2] sm:$0x1]
    %v428 = vsel %vm410, %v427, 0.0
    %429 = vadd.xlane.f32.xlu0 %v428
    %v430 = vpop.xlane.xlu0 %429
    %v431 = vrot.slane %v430, 4
    %v432 = vadd.f32 %v430, %v431
    %v433 = vrot.slane %v432, 2
    %v434 = vadd.f32 %v432, %v433
    %v435 = vrot.slane %v434, 1
    %v436 = vadd.f32 %v434, %v435
    %s437 = vtos %v436
    %v438 = vstv %s437
    %v439 = vadd.f32 %v438, 0.0
    %440 = vst [vmem:[%s4] sm:$0xff] %v439
    %v441 = vld [vmem:[#allocation3] sm:$0x1]
    %v442 = vsel %vm410, %v441, 0.0
    %443 = vadd.xlane.f32.xlu0 %v442
    %v444 = vpop.xlane.xlu0 %443
    %v445 = vrot.slane %v444, 4
    %v446 = vadd.f32 %v444, %v445
    %v447 = vrot.slane %v446, 2
    %v448 = vadd.f32 %v446, %v447
    %v449 = vrot.slane %v448, 1
    %v450 = vadd.f32 %v448, %v449
    %s451 = vtos %v450
    %v452 = vstv %s451
    %v453 = vadd.f32 %v452, 0.0
    %454 = vst [vmem:[%s5] sm:$0xff] %v453
  $region25: #{_cmal_precision_counts.1} parent=0 // pred_fallthru
    _
  // Predicated region
  $region26: #{_cmal_precision_counts.1} parent=0 // pred_check
    _
  $region27: #{_cmal_precision_counts.1} parent=0 // pred_check_branch
    %456 = sbr.rel (0) target = $region29
  $region28: #{_cmal_precision_counts.1} parent=0 // pred_region
    _
  $region29: #{_cmal_precision_counts.1} parent=0 // pred_fallthru
    _
  // Predicated region
  $region30: #{_cmal_precision_counts.1} parent=0 // pred_check
    _
  $region31: #{_cmal_precision_counts.1} parent=0 // pred_check_branch
    %458 = sbr.rel (0) target = $region33
  $region32: #{_cmal_precision_counts.1} parent=0 // pred_region
    _
  $region33: #{_cmal_precision_counts.1} parent=0 // pred_fallthru
    _
  // Predicated region
  $region34: #{_cmal_precision_counts.1} parent=0 // pred_check
    _
  $region35: #{_cmal_precision_counts.1} parent=0 // pred_check_branch
    %460 = sbr.rel (0) target = $region37
  $region36: #{_cmal_precision_counts.1} parent=0 // pred_region
    _
  $region37: #{_cmal_precision_counts.1} parent=0 // pred_fallthru
    _
  // Predicated region
  $region38: #{_cmal_precision_counts.1} parent=0 // pred_check
    _
  $region39: #{_cmal_precision_counts.1} parent=0 // pred_check_branch
    %462 = sbr.rel (0) target = $region41
  $region40: #{_cmal_precision_counts.1} parent=0 // pred_region
    _
  $region41: #{_cmal_precision_counts.1} parent=0 // pred_fallthru
    _

</llo_original>
